<compile_context>
chip_gen: v5e
topology: v5e:2x2
jax: 0.10.0
libtpu: 0.0.40
codegen_flags: <defaults>
</compile_context>

<pallas_src>
import jax
import jax.numpy as jnp
from jax.experimental import pallas as pl
from jax.experimental.pallas import tpu as pltpu

LANE = 128
NEG_MASK = -1e30  # finite "minus infinity" baked into padded b3 lanes


def _round_up(n, m):
    return ((n + m - 1) // m) * m


def mlp_kernel(x_ref, w1_ref, b1_ref, w2_ref, b2_ref, w3_ref, b3_ref, o_ref):
    # x arrives as f32; cast to bf16 in-kernel (native-rate MXU operands).
    x = x_ref[...].astype(jnp.bfloat16)                               # (bt, in)
    # fc1 + relu  (bf16 MXU, f32 accumulate / bias / relu)
    h1 = jnp.dot(x, w1_ref[...], preferred_element_type=jnp.float32) + b1_ref[...]
    h1 = jnp.maximum(h1, 0.0).astype(jnp.bfloat16)
    # fc2 + relu
    h2 = jnp.dot(h1, w2_ref[...], preferred_element_type=jnp.float32) + b2_ref[...]
    h2 = jnp.maximum(h2, 0.0).astype(jnp.bfloat16)
    # fc3 -- padded class lanes already carry -1e30 via the baked b3 bias
    # (padded w3 columns are zero), so no in-kernel mask is needed.
    logits = jnp.dot(h2, w3_ref[...], preferred_element_type=jnp.float32) + b3_ref[...]
    # log_softmax over dim=1, numerically stable (exp/log go to the EUP slot).
    m = jnp.max(logits, axis=-1, keepdims=True)
    shifted = logits - m
    lse = jnp.log(jnp.sum(jnp.exp(shifted), axis=-1, keepdims=True))
    o_ref[...] = (shifted - lse).astype(o_ref.dtype)


def prepare_params(params):
    """One-time prep: lane-pad to 128, cast weights to bf16, bake the class-lane
    mask into b3.  Call once (outside the training/inference step)."""
    w1, b1 = params["w1"], params["b1"]
    w2, b2 = params["w2"], params["b2"]
    w3, b3 = params["w3"], params["b3"]
    in_dim = w1.shape[0]
    h1, h2, out_dim = w1.shape[1], w2.shape[1], w3.shape[1]
    h1p, h2p, outp = _round_up(h1, LANE), _round_up(h2, LANE), _round_up(out_dim, LANE)

    def pad2(a, rows, cols, cval=0.0):
        return jnp.pad(a, ((0, rows - a.shape[0]), (0, cols - a.shape[1])),
                       constant_values=cval)

    return {
        "w1": pad2(w1, in_dim, h1p).astype(jnp.bfloat16),
        "b1": pad2(b1, 1, h1p).astype(jnp.float32),
        "w2": pad2(w2, h1p, h2p).astype(jnp.bfloat16),
        "b2": pad2(b2, 1, h2p).astype(jnp.float32),
        "w3": pad2(w3, h2p, outp).astype(jnp.bfloat16),
        "b3": pad2(b3, 1, outp, cval=NEG_MASK).astype(jnp.float32),
        "in_dim": in_dim, "h1p": h1p, "h2p": h2p, "outp": outp, "out_dim": out_dim,
    }


def mlp_forward(x, prepared, *, batch_tile=None):
    """x: (B, input_size) float32.  prepared: output of prepare_params()."""
    B, in_dim = x.shape
    assert in_dim == prepared["in_dim"]
    h1p, h2p, outp = prepared["h1p"], prepared["h2p"], prepared["outp"]
    out_dim = prepared["out_dim"]

    if batch_tile is None:
        # Small batch: one grid step (per-step overhead dominates).
        # Large batch: 256-row tiles so multi-TC chips get several steps each.
        batch_tile = _round_up(B, 8) if B <= 256 else 256

    n_tiles = pl.cdiv(B, batch_tile)
    Bp = n_tiles * batch_tile
    xp = x if Bp == B else jnp.pad(x, ((0, Bp - B), (0, 0)))  # ragged batches only

    out_padded = pl.pallas_call(
        mlp_kernel,
        out_shape=jax.ShapeDtypeStruct((Bp, outp), jnp.float32),
        grid_spec=pltpu.PrefetchScalarGridSpec(
            num_scalar_prefetch=0,
            grid=(n_tiles,),
            in_specs=[
                pl.BlockSpec((batch_tile, in_dim), lambda i: (i, 0)),  # x tile (streamed)
                pl.BlockSpec((in_dim, h1p), lambda i: (0, 0)),         # w1 (resident)
                pl.BlockSpec((1, h1p), lambda i: (0, 0)),              # b1
                pl.BlockSpec((h1p, h2p), lambda i: (0, 0)),            # w2
                pl.BlockSpec((1, h2p), lambda i: (0, 0)),              # b2
                pl.BlockSpec((h2p, outp), lambda i: (0, 0)),           # w3
                pl.BlockSpec((1, outp), lambda i: (0, 0)),             # b3 (mask baked in)
            ],
            out_specs=pl.BlockSpec((batch_tile, outp), lambda i: (i, 0)),
        ),
        compiler_params=pltpu.CompilerParams(
            dimension_semantics=("parallel",),
        ),
    )(xp, prepared["w1"], prepared["b1"], prepared["w2"], prepared["b2"],
      prepared["w3"], prepared["b3"])

    return out_padded[:B, :out_dim]


def init_params(key, input_size=28 * 28, output_size=10, layers=(120, 84)):
    """Deterministic synthetic parameters with PyTorch nn.Linear fan-in scaling.
    Stored as (in, out) = PyTorch weight.T, biases as (1, out)."""
    dims = [input_size, layers[0], layers[1], output_size]
    params = {}
    for idx in range(3):
        key, kw, kb = jax.random.split(key, 3)
        fan_in, fan_out = dims[idx], dims[idx + 1]
        bound = 1.0 / jnp.sqrt(fan_in)
        params[f"w{idx + 1}"] = jax.random.uniform(
            kw, (fan_in, fan_out), jnp.float32, -bound, bound)
        params[f"b{idx + 1}"] = jax.random.uniform(
            kb, (1, fan_out), jnp.float32, -bound, bound)
    return params


def mlp_reference(x, params):
    """Reference with the same bf16 operand / f32 accumulate quantization."""
    w1 = params["w1"].astype(jnp.bfloat16)
    w2 = params["w2"].astype(jnp.bfloat16)
    w3 = params["w3"].astype(jnp.bfloat16)
    h = jnp.dot(x.astype(jnp.bfloat16), w1,
                preferred_element_type=jnp.float32) + params["b1"]
    h = jnp.maximum(h, 0.0).astype(jnp.bfloat16)
    h = jnp.dot(h, w2, preferred_element_type=jnp.float32) + params["b2"]
    h = jnp.maximum(h, 0.0).astype(jnp.bfloat16)
    logits = jnp.dot(h, w3, preferred_element_type=jnp.float32) + params["b3"]
    return jax.nn.log_softmax(logits, axis=1)


if __name__ == "__main__":
    key = jax.random.PRNGKey(0)
    kx, kxr, kp = jax.random.split(key, 3)

    INPUT, OUT = 28 * 28, 10
    params = init_params(kp)
    prepared = jax.tree_util.tree_map(
        jax.block_until_ready,
        prepare_params(params))   # one-time weight pad/cast, off the hot path

    # Small aligned batch: single grid step.
    B = 64
    x = jax.random.normal(kx, (B, INPUT), jnp.float32)
    out = jax.block_until_ready(mlp_forward(x, prepared))
    ref = mlp_reference(x, params)
    assert out.shape == (B, OUT)
    assert jnp.isfinite(out).all()
    assert jnp.allclose(out, ref, atol=2e-3, rtol=2e-3), "mismatch vs reference (aligned batch)"

    # Ragged batch: exercises the pad-to-tile + slice-back path.
    Br = 37
    xr = jax.random.normal(kxr, (Br, INPUT), jnp.float32)
    out_r = jax.block_until_ready(mlp_forward(xr, prepared))
    ref_r = mlp_reference(xr, params)
    assert out_r.shape == (Br, OUT)
    assert jnp.isfinite(out_r).all()
    assert jnp.allclose(out_r, ref_r, atol=2e-3, rtol=2e-3), "mismatch vs reference (ragged batch)"

    print("KERNEL_OK")
</pallas_src>

<mosaic_0001>
module attributes {stable_mosaic.version = 11 : i64} {
  func.func @mlp_kernel(%arg0: i32, %arg1: memref<64x784xf32, #tpu.memory_space<vmem>>, %arg2: memref<784x128xbf16, #tpu.memory_space<vmem>>, %arg3: memref<1x128xf32, #tpu.memory_space<vmem>>, %arg4: memref<128x128xbf16, #tpu.memory_space<vmem>>, %arg5: memref<1x128xf32, #tpu.memory_space<vmem>>, %arg6: memref<128x128xbf16, #tpu.memory_space<vmem>>, %arg7: memref<1x128xf32, #tpu.memory_space<vmem>>, %arg8: memref<64x128xf32, #tpu.memory_space<vmem>>) attributes {dimension_semantics = [#tpu.dimension_semantics<parallel>], iteration_bounds = array<i64: 1>, scalar_prefetch = 0 : i64, scratch_operands = 0 : i64, tpu.core_type = #tpu.core_type<tc>, window_params = [{transform_indices = @transform_0, window_bounds = array<i64: 64, 784>}, {pipeline_mode = #tpu.pipeline_mode<synchronous>, transform_indices = @transform_1, window_bounds = array<i64: 784, 128>}, {pipeline_mode = #tpu.pipeline_mode<synchronous>, transform_indices = @transform_2, window_bounds = array<i64: 1, 128>}, {pipeline_mode = #tpu.pipeline_mode<synchronous>, transform_indices = @transform_3, window_bounds = array<i64: 128, 128>}, {pipeline_mode = #tpu.pipeline_mode<synchronous>, transform_indices = @transform_4, window_bounds = array<i64: 1, 128>}, {pipeline_mode = #tpu.pipeline_mode<synchronous>, transform_indices = @transform_5, window_bounds = array<i64: 128, 128>}, {pipeline_mode = #tpu.pipeline_mode<synchronous>, transform_indices = @transform_6, window_bounds = array<i64: 1, 128>}, {transform_indices = @transform_7, window_bounds = array<i64: 64, 128>}]} {
    %c0 = arith.constant 0 : index
    %c0_0 = arith.constant 0 : index
    %0 = vector.load %arg1[%c0, %c0_0] : memref<64x784xf32, #tpu.memory_space<vmem>>, vector<64x784xf32>
    %1 = arith.truncf %0 : vector<64x784xf32> to vector<64x784xbf16>
    %c0_1 = arith.constant 0 : index
    %c0_2 = arith.constant 0 : index
    %2 = vector.load %arg2[%c0_1, %c0_2] : memref<784x128xbf16, #tpu.memory_space<vmem>>, vector<784x128xbf16>
    %cst = arith.constant dense<0.000000e+00> : vector<64x128xf32>
    %3 = tpu.matmul %1, %2, %cst {dimension_numbers = #tpu.dot_dimension_numbers<[1], [0], [0], [1], [0, 0, 1, 1], [], []>} : vector<64x784xbf16>, vector<784x128xbf16>, vector<64x128xf32> -> vector<64x128xf32>
    %c0_3 = arith.constant 0 : index
    %c0_4 = arith.constant 0 : index
    %4 = vector.load %arg3[%c0_3, %c0_4] : memref<1x128xf32, #tpu.memory_space<vmem>>, vector<1x128xf32>
    %5 = vector.broadcast %4 : vector<1x128xf32> to vector<64x128xf32>
    %6 = arith.addf %3, %5 : vector<64x128xf32>
    %cst_5 = arith.constant 0.000000e+00 : f32
    %7 = vector.broadcast %cst_5 : f32 to vector<64x128xf32>
    %8 = arith.maximumf %6, %7 : vector<64x128xf32>
    %9 = arith.truncf %8 : vector<64x128xf32> to vector<64x128xbf16>
    %c0_6 = arith.constant 0 : index
    %c0_7 = arith.constant 0 : index
    %10 = vector.load %arg4[%c0_6, %c0_7] : memref<128x128xbf16, #tpu.memory_space<vmem>>, vector<128x128xbf16>
    %cst_8 = arith.constant dense<0.000000e+00> : vector<64x128xf32>
    %11 = tpu.matmul %9, %10, %cst_8 {dimension_numbers = #tpu.dot_dimension_numbers<[1], [0], [0], [1], [0, 0, 1, 1], [], []>} : vector<64x128xbf16>, vector<128x128xbf16>, vector<64x128xf32> -> vector<64x128xf32>
    %c0_9 = arith.constant 0 : index
    %c0_10 = arith.constant 0 : index
    %12 = vector.load %arg5[%c0_9, %c0_10] : memref<1x128xf32, #tpu.memory_space<vmem>>, vector<1x128xf32>
    %13 = vector.broadcast %12 : vector<1x128xf32> to vector<64x128xf32>
    %14 = arith.addf %11, %13 : vector<64x128xf32>
    %cst_11 = arith.constant 0.000000e+00 : f32
    %15 = vector.broadcast %cst_11 : f32 to vector<64x128xf32>
    %16 = arith.maximumf %14, %15 : vector<64x128xf32>
    %17 = arith.truncf %16 : vector<64x128xf32> to vector<64x128xbf16>
    %c0_12 = arith.constant 0 : index
    %c0_13 = arith.constant 0 : index
    %18 = vector.load %arg6[%c0_12, %c0_13] : memref<128x128xbf16, #tpu.memory_space<vmem>>, vector<128x128xbf16>
    %cst_14 = arith.constant dense<0.000000e+00> : vector<64x128xf32>
    %19 = tpu.matmul %17, %18, %cst_14 {dimension_numbers = #tpu.dot_dimension_numbers<[1], [0], [0], [1], [0, 0, 1, 1], [], []>} : vector<64x128xbf16>, vector<128x128xbf16>, vector<64x128xf32> -> vector<64x128xf32>
    %c0_15 = arith.constant 0 : index
    %c0_16 = arith.constant 0 : index
    %20 = vector.load %arg7[%c0_15, %c0_16] : memref<1x128xf32, #tpu.memory_space<vmem>>, vector<1x128xf32>
    %21 = vector.broadcast %20 : vector<1x128xf32> to vector<64x128xf32>
    %22 = arith.addf %19, %21 : vector<64x128xf32>
    %cst_17 = arith.constant dense<0xFF800000> : vector<64xf32>
    %23 = vector.multi_reduction <maximumf>, %22, %cst_17 [1] : vector<64x128xf32> to vector<64xf32>
    %24 = vector.shape_cast %23 : vector<64xf32> to vector<64x1xf32>
    %25 = vector.broadcast %24 : vector<64x1xf32> to vector<64x128xf32>
    %26 = arith.subf %22, %25 : vector<64x128xf32>
    %27 = math.exp %26 : vector<64x128xf32>
    %cst_18 = arith.constant dense<0.000000e+00> : vector<64xf32>
    %28 = vector.multi_reduction <add>, %27, %cst_18 [1] : vector<64x128xf32> to vector<64xf32>
    %29 = vector.shape_cast %28 : vector<64xf32> to vector<64x1xf32>
    %30 = math.log %29 : vector<64x1xf32>
    %31 = vector.broadcast %30 : vector<64x1xf32> to vector<64x128xf32>
    %32 = arith.subf %26, %31 : vector<64x128xf32>
    %c0_19 = arith.constant 0 : index
    %c0_20 = arith.constant 0 : index
    %33 = vector.load %arg8[%c0_19, %c0_20] : memref<64x128xf32, #tpu.memory_space<vmem>>, vector<64x128xf32>
    tpu.vector_store %arg8[%c0_19, %c0_20], %32 {strides = array<i32>} : memref<64x128xf32, #tpu.memory_space<vmem>>, vector<64x128xf32>,
    return
  }
  func.func @transform_0(%arg0: i32) -> (i32, i32) {
    %c0_i32 = arith.constant 0 : i32
    %c0_i32_0 = arith.constant 0 : i32
    return %arg0, %c0_i32 : i32, i32
  }
  func.func @transform_1(%arg0: i32) -> (i32, i32) {
    %c0_i32 = arith.constant 0 : i32
    %c0_i32_0 = arith.constant 0 : i32
    %c0_i32_1 = arith.constant 0 : i32
    return %c0_i32, %c0_i32_0 : i32, i32
  }
  func.func @transform_2(%arg0: i32) -> (i32, i32) {
    %c0_i32 = arith.constant 0 : i32
    %c0_i32_0 = arith.constant 0 : i32
    %c0_i32_1 = arith.constant 0 : i32
    return %c0_i32, %c0_i32_0 : i32, i32
  }
  func.func @transform_3(%arg0: i32) -> (i32, i32) {
    %c0_i32 = arith.constant 0 : i32
    %c0_i32_0 = arith.constant 0 : i32
    %c0_i32_1 = arith.constant 0 : i32
    return %c0_i32, %c0_i32_0 : i32, i32
  }
  func.func @transform_4(%arg0: i32) -> (i32, i32) {
    %c0_i32 = arith.constant 0 : i32
    %c0_i32_0 = arith.constant 0 : i32
    %c0_i32_1 = arith.constant 0 : i32
    return %c0_i32, %c0_i32_0 : i32, i32
  }
  func.func @transform_5(%arg0: i32) -> (i32, i32) {
    %c0_i32 = arith.constant 0 : i32
    %c0_i32_0 = arith.constant 0 : i32
    %c0_i32_1 = arith.constant 0 : i32
    return %c0_i32, %c0_i32_0 : i32, i32
  }
  func.func @transform_6(%arg0: i32) -> (i32, i32) {
    %c0_i32 = arith.constant 0 : i32
    %c0_i32_0 = arith.constant 0 : i32
    %c0_i32_1 = arith.constant 0 : i32
    return %c0_i32, %c0_i32_0 : i32, i32
  }
  func.func @transform_7(%arg0: i32) -> (i32, i32) {
    %c0_i32 = arith.constant 0 : i32
    %c0_i32_0 = arith.constant 0 : i32
    return %arg0, %c0_i32 : i32, i32
  }
}

</mosaic_0001>

<llo_original>
// kernel: tpu_custom_call.1
$region0: #{tpu_custom_call.1}
  #allocation0 [shape = 'u32[]', space=smem, size = 0x4, offset = 0x4, fixed_abs, tag = 'smem constant byte address 0x4 - core index']
  #allocation1 [shape = 'u32[72,128]{1,0:T(1,128)}', space=vmem, size = 0x9000, scoped, tag = 'internal scratch']
  %s0 = inlined_call_operand.hbm [shape: f32[64,784], index: 0, kind: input, shape index: {}]
  %s1 = inlined_call_operand.hbm [shape: bf16[784,128], index: 1, kind: input, shape index: {}]
  %s2 = inlined_call_operand.vmem [shape: f32[1,128], index: 2, kind: input, shape index: {}]
  %s3 = inlined_call_operand.hbm [shape: bf16[128,128], index: 3, kind: input, shape index: {}]
  %s4 = inlined_call_operand.vmem [shape: f32[1,128], index: 4, kind: input, shape index: {}]
  %s5 = inlined_call_operand.hbm [shape: bf16[128,128], index: 5, kind: input, shape index: {}]
  %s6 = inlined_call_operand.vmem [shape: f32[1,128], index: 6, kind: input, shape index: {}]
  %s7 = inlined_call_operand.hbm [shape: f32[64,128], index: 7, kind: output, shape index: {}]
  %s8 = sld [smem:[#allocation0]]
  $region54: #{tpu_custom_call.1} parent=0
    _
  %s10 = ssub.s32 1, %s8
  %s11 = scalar_select 0, %s10, %s8
  $region1: #{tpu_custom_call.1} parent=0
    #allocation2 [shape = 'u8[229376]{0}', space=vmem, size = 0x38000, scoped, tag = 'input window, operand 0, single buffered']
    #allocation3 [shape = 's32[1]{0}', space=sflag, size = 0x4, scoped, tag = 'scoped memory for tpu_custom_call.1']
    #allocation4 [shape = 's32[1]{0}', space=sflag, size = 0x4, scoped, tag = 'scoped memory for tpu_custom_call.1']
    #allocation5 [shape = 'u8[200704]{0}', space=vmem, size = 0x31000, scoped, tag = 'input window, operand 1, single buffered']
    #allocation6 [shape = 's32[1]{0}', space=sflag, size = 0x4, scoped, tag = 'scoped memory for tpu_custom_call.1']
    #allocation7 [shape = 'u8[32768]{0}', space=vmem, size = 0x8000, scoped, tag = 'input window, operand 3, single buffered']
    #allocation8 [shape = 'u8[32768]{0}', space=vmem, size = 0x8000, scoped, tag = 'input window, operand 5, single buffered']
    #allocation9 [shape = 's32[1]{0}', space=sflag, size = 0x4, scoped, tag = 'scoped memory for tpu_custom_call.1']
    #allocation10 [shape = 'u8[32768]{0}', space=vmem, size = 0x8000, scoped, tag = 'output window, operand 0, single buffered']
    %12 = vsyncpa [#allocation3], 0
    %13 = vsyncpa [#allocation6], 0
    %14 = vsyncpa [#allocation9], 0
    %15 = vsyncpa [#allocation4], 0
    // Predicated region
    $region2: #{tpu_custom_call.1} parent=1 // pred_check
      _
    $region3: #{tpu_custom_call.1} parent=1 // pred_check_branch
      %17 = sbr.rel (0) target = $region5
    $region4: #{tpu_custom_call.1} parent=1 // pred_region
      %19 = vsyncadd [#allocation3], 0
      %s20 = sshll.u32 %s0, 4
      %s21 = int_to_ptr.hbm [resolvable:$true] %s20
      %s22 = sshll.u32 [#allocation2], 4
      %s23 = int_to_ptr.vmem [resolvable:$true] %s22
      %28 = dma.hbm_to_vmem [thread:$0]  %s21, 7168, %s23, [#allocation3], 896, 896, 56
    $region5: #{tpu_custom_call.1} parent=1 // pred_fallthru
      _
    // Predicated region
    $region6: #{tpu_custom_call.1} parent=1 // pred_check
      _
    $region7: #{tpu_custom_call.1} parent=1 // pred_check_branch
      %30 = sbr.rel (0) target = $region9
    $region8: #{tpu_custom_call.1} parent=1 // pred_region
      %32 = vsyncadd [#allocation6], 0
      %s33 = sshll.u32 %s1, 4
      %s34 = int_to_ptr.hbm [resolvable:$true] %s33
      %s35 = sshll.u32 [#allocation5], 4
      %s36 = int_to_ptr.vmem [resolvable:$true] %s35
      %41 = dma.hbm_to_vmem [thread:$0]  %s34, 6272, %s36, [#allocation6], 64, 64, 4
    $region9: #{tpu_custom_call.1} parent=1 // pred_fallthru
      _
    // Predicated region
    $region10: #{tpu_custom_call.1} parent=1 // pred_check
      _
    $region11: #{tpu_custom_call.1} parent=1 // pred_check_branch
      %43 = sbr.rel (0) target = $region13
    $region12: #{tpu_custom_call.1} parent=1 // pred_region
      _
    $region13: #{tpu_custom_call.1} parent=1 // pred_fallthru
      _
    // Predicated region
    $region14: #{tpu_custom_call.1} parent=1 // pred_check
      _
    $region15: #{tpu_custom_call.1} parent=1 // pred_check_branch
      %45 = sbr.rel (0) target = $region17
    $region16: #{tpu_custom_call.1} parent=1 // pred_region
      %47 = vsyncadd [#allocation6], 0
      %s48 = sshll.u32 %s3, 4
      %s49 = int_to_ptr.hbm [resolvable:$true] %s48
      %s50 = sshll.u32 [#allocation7], 4
      %s51 = int_to_ptr.vmem [resolvable:$true] %s50
      %56 = dma.hbm_to_vmem [thread:$0]  %s49, 1024, %s51, [#allocation6], 64, 64, 4
    $region17: #{tpu_custom_call.1} parent=1 // pred_fallthru
      _
    // Predicated region
    $region18: #{tpu_custom_call.1} parent=1 // pred_check
      _
    $region19: #{tpu_custom_call.1} parent=1 // pred_check_branch
      %58 = sbr.rel (0) target = $region21
    $region20: #{tpu_custom_call.1} parent=1 // pred_region
      _
    $region21: #{tpu_custom_call.1} parent=1 // pred_fallthru
      _
    // Predicated region
    $region22: #{tpu_custom_call.1} parent=1 // pred_check
      _
    $region23: #{tpu_custom_call.1} parent=1 // pred_check_branch
      %60 = sbr.rel (0) target = $region25
    $region24: #{tpu_custom_call.1} parent=1 // pred_region
      %62 = vsyncadd [#allocation9], 0
      %s63 = sshll.u32 %s5, 4
      %s64 = int_to_ptr.hbm [resolvable:$true] %s63
      %s65 = sshll.u32 [#allocation8], 4
      %s66 = int_to_ptr.vmem [resolvable:$true] %s65
      %71 = dma.hbm_to_vmem [thread:$0]  %s64, 1024, %s66, [#allocation9], 64, 64, 4
    $region25: #{tpu_custom_call.1} parent=1 // pred_fallthru
      _
    // Predicated region
    $region26: #{tpu_custom_call.1} parent=1 // pred_check
      _
    $region27: #{tpu_custom_call.1} parent=1 // pred_check_branch
      %73 = sbr.rel (0) target = $region29
    $region28: #{tpu_custom_call.1} parent=1 // pred_region
      _
    $region29: #{tpu_custom_call.1} parent=1 // pred_fallthru
      _
    // Predicated region
    $region30: #{tpu_custom_call.1} parent=1 // pred_check
      _
    $region31: #{tpu_custom_call.1} parent=1 // pred_check_branch
      %75 = sbr.rel (0) target = $region33
    $region32: #{tpu_custom_call.1} parent=1 // pred_region
      %77 = dma.done [#allocation3], 7168
    $region33: #{tpu_custom_call.1} parent=1 // pred_fallthru
      _
    // Predicated region
    $region34: #{tpu_custom_call.1} parent=1 // pred_check
      _
    $region35: #{tpu_custom_call.1} parent=1 // pred_check_branch
      %79 = sbr.rel (0) target = $region37
    $region36: #{tpu_custom_call.1} parent=1 // pred_region
      %81 = dma.done [#allocation6], 6272
    $region37: #{tpu_custom_call.1} parent=1 // pred_fallthru
      _
    // Predicated region
    $region38: #{tpu_custom_call.1} parent=1 // pred_check
      _
    $region39: #{tpu_custom_call.1} parent=1 // pred_check_branch
      %83 = sbr.rel (0) target = $region41
    $region40: #{tpu_custom_call.1} parent=1 // pred_region
      %85 = dma.done [#allocation6], 1024
    $region41: #{tpu_custom_call.1} parent=1 // pred_fallthru
      _
    // Predicated region
    $region42: #{tpu_custom_call.1} parent=1 // pred_check
      _
    $region43: #{tpu_custom_call.1} parent=1 // pred_check_branch
      %87 = sbr.rel (0) target = $region45
    $region44: #{tpu_custom_call.1} parent=1 // pred_region
      %89 = dma.done [#allocation9], 1024
    $region45: #{tpu_custom_call.1} parent=1 // pred_fallthru
      _
    %v91 = vld [vmem:[#allocation2] sm:$0xff]
    %v92 = vld [vmem:[#allocation2 + $0x8] sm:$0xff]
    %v93 = vld [vmem:[#allocation2 + $0x10] sm:$0xff]
    %v94 = vld [vmem:[#allocation2 + $0x18] sm:$0xff]
    %v95 = vld [vmem:[#allocation2 + $0x20] sm:$0xff]
    %v96 = vld [vmem:[#allocation2 + $0x28] sm:$0xff]
    %v97 = vld [vmem:[#allocation2 + $0x30] sm:$0xff]
    %v98 = vld [vmem:[#allocation2 + $0x38] sm:$0xff]
    %v99 = vld [vmem:[#allocation2 + $0x40] sm:$0xff]
    %v100 = vld [vmem:[#allocation2 + $0x48] sm:$0xff]
    %v101 = vld [vmem:[#allocation2 + $0x50] sm:$0xff]
    %v102 = vld [vmem:[#allocation2 + $0x58] sm:$0xff]
    %v103 = vld [vmem:[#allocation2 + $0x60] sm:$0xff]
    %v104 = vld [vmem:[#allocation2 + $0x68] sm:$0xff]
    %v105 = vld [vmem:[#allocation2 + $0x70] sm:$0xff]
    %v106 = vld [vmem:[#allocation2 + $0x78] sm:$0xff]
    %v107 = vld [vmem:[#allocation2 + $0x80] sm:$0xff]
    %v108 = vld [vmem:[#allocation2 + $0x88] sm:$0xff]
    %v109 = vld [vmem:[#allocation2 + $0x90] sm:$0xff]
    %v110 = vld [vmem:[#allocation2 + $0x98] sm:$0xff]
    %v111 = vld [vmem:[#allocation2 + $0xa0] sm:$0xff]
    %v112 = vld [vmem:[#allocation2 + $0xa8] sm:$0xff]
    %v113 = vld [vmem:[#allocation2 + $0xb0] sm:$0xff]
    %v114 = vld [vmem:[#allocation2 + $0xb8] sm:$0xff]
    %v115 = vld [vmem:[#allocation2 + $0xc0] sm:$0xff]
    %v116 = vld [vmem:[#allocation2 + $0xc8] sm:$0xff]
    %v117 = vld [vmem:[#allocation2 + $0xd0] sm:$0xff]
    %v118 = vld [vmem:[#allocation2 + $0xd8] sm:$0xff]
    %v119 = vld [vmem:[#allocation2 + $0xe0] sm:$0xff]
    %v120 = vld [vmem:[#allocation2 + $0xe8] sm:$0xff]
    %v121 = vld [vmem:[#allocation2 + $0xf0] sm:$0xff]
    %v122 = vld [vmem:[#allocation2 + $0xf8] sm:$0xff]
    %v123 = vld [vmem:[#allocation2 + $0x100] sm:$0xff]
    %v124 = vld [vmem:[#allocation2 + $0x108] sm:$0xff]
    %v125 = vld [vmem:[#allocation2 + $0x110] sm:$0xff]
    %v126 = vld [vmem:[#allocation2 + $0x118] sm:$0xff]
    %v127 = vld [vmem:[#allocation2 + $0x120] sm:$0xff]
    %v128 = vld [vmem:[#allocation2 + $0x128] sm:$0xff]
    %v129 = vld [vmem:[#allocation2 + $0x130] sm:$0xff]
    %v130 = vld [vmem:[#allocation2 + $0x138] sm:$0xff]
    %v131 = vld [vmem:[#allocation2 + $0x140] sm:$0xff]
    %v132 = vld [vmem:[#allocation2 + $0x148] sm:$0xff]
    %v133 = vld [vmem:[#allocation2 + $0x150] sm:$0xff]
    %v134 = vld [vmem:[#allocation2 + $0x158] sm:$0xff]
    %v135 = vld [vmem:[#allocation2 + $0x160] sm:$0xff]
    %v136 = vld [vmem:[#allocation2 + $0x168] sm:$0xff]
    %v137 = vld [vmem:[#allocation2 + $0x170] sm:$0xff]
    %v138 = vld [vmem:[#allocation2 + $0x178] sm:$0xff]
    %v139 = vld [vmem:[#allocation2 + $0x180] sm:$0xff]
    %v140 = vld [vmem:[#allocation2 + $0x188] sm:$0xff]
    %v141 = vld [vmem:[#allocation2 + $0x190] sm:$0xff]
    %v142 = vld [vmem:[#allocation2 + $0x198] sm:$0xff]
    %v143 = vld [vmem:[#allocation2 + $0x1a0] sm:$0xff]
    %v144 = vld [vmem:[#allocation2 + $0x1a8] sm:$0xff]
    %v145 = vld [vmem:[#allocation2 + $0x1b0] sm:$0xff]
    %v146 = vld [vmem:[#allocation2 + $0x1b8] sm:$0xff]
    %v147 = vpack.c.bf16 %v98, %v91
    %v148 = vpack.c.bf16 %v99, %v92
    %v149 = vpack.c.bf16 %v100, %v93
    %v150 = vpack.c.bf16 %v101, %v94
    %v151 = vpack.c.bf16 %v102, %v95
    %v152 = vpack.c.bf16 %v103, %v96
    %v153 = vpack.c.bf16 %v104, %v97
    %v154 = vpack.c.bf16 %v112, %v105
    %v155 = vpack.c.bf16 %v113, %v106
    %v156 = vpack.c.bf16 %v114, %v107
    %v157 = vpack.c.bf16 %v115, %v108
    %v158 = vpack.c.bf16 %v116, %v109
    %v159 = vpack.c.bf16 %v117, %v110
    %v160 = vpack.c.bf16 %v118, %v111
    %v161 = vpack.c.bf16 %v126, %v119
    %v162 = vpack.c.bf16 %v127, %v120
    %v163 = vpack.c.bf16 %v128, %v121
    %v164 = vpack.c.bf16 %v129, %v122
    %v165 = vpack.c.bf16 %v130, %v123
    %v166 = vpack.c.bf16 %v131, %v124
    %v167 = vpack.c.bf16 %v132, %v125
    %v168 = vpack.c.bf16 %v140, %v133
    %v169 = vpack.c.bf16 %v141, %v134
    %v170 = vpack.c.bf16 %v142, %v135
    %v171 = vpack.c.bf16 %v143, %v136
    %v172 = vpack.c.bf16 %v144, %v137
    %v173 = vpack.c.bf16 %v145, %v138
    %v174 = vpack.c.bf16 %v146, %v139
    %v175 = vld [vmem:[#allocation5] sm:$0xf]
    %v176 = vld [vmem:[#allocation5 + $0x4] sm:$0xf]
    %v177 = vld [vmem:[#allocation5 + $0x8] sm:$0xf]
    %v178 = vld [vmem:[#allocation5 + $0xc] sm:$0xf]
    %v179 = vld [vmem:[#allocation5 + $0x10] sm:$0xf]
    %v180 = vld [vmem:[#allocation5 + $0x14] sm:$0xf]
    %v181 = vld [vmem:[#allocation5 + $0x18] sm:$0xf]
    %v182 = vld [vmem:[#allocation5 + $0x1c] sm:$0xf]
    %v183 = vld [vmem:[#allocation5 + $0x20] sm:$0xf]
    %v184 = vld [vmem:[#allocation5 + $0x24] sm:$0xf]
    %v185 = vld [vmem:[#allocation5 + $0x28] sm:$0xf]
    %v186 = vld [vmem:[#allocation5 + $0x2c] sm:$0xf]
    %v187 = vld [vmem:[#allocation5 + $0x30] sm:$0xf]
    %v188 = vld [vmem:[#allocation5 + $0x34] sm:$0xf]
    %v189 = vld [vmem:[#allocation5 + $0x38] sm:$0xf]
    %v190 = vld [vmem:[#allocation5 + $0x3c] sm:$0xf]
    %v191 = vld [vmem:[#allocation5 + $0x40] sm:$0xf]
    %v192 = vld [vmem:[#allocation5 + $0x44] sm:$0xf]
    %v193 = vld [vmem:[#allocation5 + $0x48] sm:$0xf]
    %v194 = vld [vmem:[#allocation5 + $0x4c] sm:$0xf]
    %v195 = vld [vmem:[#allocation5 + $0x50] sm:$0xf]
    %v196 = vld [vmem:[#allocation5 + $0x54] sm:$0xf]
    %v197 = vld [vmem:[#allocation5 + $0x58] sm:$0xf]
    %v198 = vld [vmem:[#allocation5 + $0x5c] sm:$0xf]
    %v199 = vld [vmem:[#allocation5 + $0x60] sm:$0xf]
    %v200 = vld [vmem:[#allocation5 + $0x64] sm:$0xf]
    %v201 = vld [vmem:[#allocation5 + $0x68] sm:$0xf]
    %v202 = vld [vmem:[#allocation5 + $0x6c] sm:$0xf]
    %v203 = vld [vmem:[#allocation5 + $0x70] sm:$0xf]
    %v204 = vld [vmem:[#allocation5 + $0x74] sm:$0xf]
    %v205 = vld [vmem:[#allocation5 + $0x78] sm:$0xf]
    %v206 = vld [vmem:[#allocation5 + $0x7c] sm:$0xf]
    %v207 = vld [vmem:[#allocation5 + $0x80] sm:$0xf]
    %v208 = vld [vmem:[#allocation5 + $0x84] sm:$0xf]
    %v209 = vld [vmem:[#allocation5 + $0x88] sm:$0xf]
    %v210 = vld [vmem:[#allocation5 + $0x8c] sm:$0xf]
    %v211 = vld [vmem:[#allocation5 + $0x90] sm:$0xf]
    %v212 = vld [vmem:[#allocation5 + $0x94] sm:$0xf]
    %v213 = vld [vmem:[#allocation5 + $0x98] sm:$0xf]
    %v214 = vld [vmem:[#allocation5 + $0x9c] sm:$0xf]
    %v215 = vld [vmem:[#allocation5 + $0xa0] sm:$0xf]
    %v216 = vld [vmem:[#allocation5 + $0xa4] sm:$0xf]
    %v217 = vld [vmem:[#allocation5 + $0xa8] sm:$0xf]
    %v218 = vld [vmem:[#allocation5 + $0xac] sm:$0xf]
    %v219 = vld [vmem:[#allocation5 + $0xb0] sm:$0xf]
    %v220 = vld [vmem:[#allocation5 + $0xb4] sm:$0xf]
    %v221 = vld [vmem:[#allocation5 + $0xb8] sm:$0xf]
    %v222 = vld [vmem:[#allocation5 + $0xbc] sm:$0xf]
    %v223 = vld [vmem:[#allocation5 + $0xc0] sm:$0xf]
    %v224 = vld [vmem:[#allocation5 + $0xc4] sm:$0xf]
    %v225 = vld [vmem:[#allocation5 + $0xc8] sm:$0xf]
    %v226 = vld [vmem:[#allocation5 + $0xcc] sm:$0xf]
    %v227 = vld [vmem:[#allocation5 + $0xd0] sm:$0xf]
    %v228 = vld [vmem:[#allocation5 + $0xd4] sm:$0xf]
    %v229 = vld [vmem:[#allocation5 + $0xd8] sm:$0xf]
    %v230 = vld [vmem:[#allocation5 + $0xdc] sm:$0xf]
    %v231 = vld [vmem:[#allocation5 + $0xe0] sm:$0xf]
    %v232 = vld [vmem:[#allocation5 + $0xe4] sm:$0xf]
    %v233 = vld [vmem:[#allocation5 + $0xe8] sm:$0xf]
    %v234 = vld [vmem:[#allocation5 + $0xec] sm:$0xf]
    %v235 = vld [vmem:[#allocation5 + $0xf0] sm:$0xf]
    %v236 = vld [vmem:[#allocation5 + $0xf4] sm:$0xf]
    %v237 = vld [vmem:[#allocation5 + $0xf8] sm:$0xf]
    %v238 = vld [vmem:[#allocation5 + $0xfc] sm:$0xf]
    %v239 = vld [vmem:[#allocation5 + $0x100] sm:$0xf]
    %v240 = vld [vmem:[#allocation5 + $0x104] sm:$0xf]
    %v241 = vld [vmem:[#allocation5 + $0x108] sm:$0xf]
    %v242 = vld [vmem:[#allocation5 + $0x10c] sm:$0xf]
    %v243 = vld [vmem:[#allocation5 + $0x110] sm:$0xf]
    %v244 = vld [vmem:[#allocation5 + $0x114] sm:$0xf]
    %v245 = vld [vmem:[#allocation5 + $0x118] sm:$0xf]
    %v246 = vld [vmem:[#allocation5 + $0x11c] sm:$0xf]
    %v247 = vld [vmem:[#allocation5 + $0x120] sm:$0xf]
    %v248 = vld [vmem:[#allocation5 + $0x124] sm:$0xf]
    %v249 = vld [vmem:[#allocation5 + $0x128] sm:$0xf]
    %v250 = vld [vmem:[#allocation5 + $0x12c] sm:$0xf]
    %v251 = vld [vmem:[#allocation5 + $0x130] sm:$0xf]
    %v252 = vld [vmem:[#allocation5 + $0x134] sm:$0xf]
    %v253 = vld [vmem:[#allocation5 + $0x138] sm:$0xf]
    %v254 = vld [vmem:[#allocation5 + $0x13c] sm:$0xf]
    %v255 = vld [vmem:[#allocation5 + $0x140] sm:$0xf]
    %v256 = vld [vmem:[#allocation5 + $0x144] sm:$0xf]
    %v257 = vld [vmem:[#allocation5 + $0x148] sm:$0xf]
    %v258 = vld [vmem:[#allocation5 + $0x14c] sm:$0xf]
    %v259 = vld [vmem:[#allocation5 + $0x150] sm:$0xf]
    %v260 = vld [vmem:[#allocation5 + $0x154] sm:$0xf]
    %v261 = vld [vmem:[#allocation5 + $0x158] sm:$0xf]
    %v262 = vld [vmem:[#allocation5 + $0x15c] sm:$0xf]
    %v263 = vld [vmem:[#allocation5 + $0x160] sm:$0xf]
    %v264 = vld [vmem:[#allocation5 + $0x164] sm:$0xf]
    %v265 = vld [vmem:[#allocation5 + $0x168] sm:$0xf]
    %v266 = vld [vmem:[#allocation5 + $0x16c] sm:$0xf]
    %v267 = vld [vmem:[#allocation5 + $0x170] sm:$0xf]
    %v268 = vld [vmem:[#allocation5 + $0x174] sm:$0xf]
    %v269 = vld [vmem:[#allocation5 + $0x178] sm:$0xf]
    %v270 = vld [vmem:[#allocation5 + $0x17c] sm:$0xf]
    %v271 = vld [vmem:[#allocation5 + $0x180] sm:$0xf]
    %v272 = vld [vmem:[#allocation5 + $0x184] sm:$0xf]
    %v273 = vld [vmem:[%s2] sm:$0x1]
    %v275 = vperm.slane %v273, 0
    %v375 = vunpack.c.l.b16 %v175
    %v376 = vunpack.c.l.b16 %v176
    %v377 = vunpack.c.l.b16 %v177
    %v378 = vunpack.c.l.b16 %v178
    %v379 = vunpack.c.l.b16 %v179
    %v380 = vunpack.c.l.b16 %v180
    %v381 = vunpack.c.l.b16 %v181
    %v382 = vunpack.c.l.b16 %v182
    %v383 = vunpack.c.l.b16 %v183
    %v384 = vunpack.c.l.b16 %v184
    %v385 = vunpack.c.l.b16 %v185
    %v386 = vunpack.c.l.b16 %v186
    %v387 = vunpack.c.l.b16 %v187
    %v388 = vunpack.c.l.b16 %v188
    %v389 = vunpack.c.l.b16 %v189
    %v390 = vunpack.c.l.b16 %v190
    %v391 = vunpack.c.l.b16 %v191
    %v392 = vunpack.c.l.b16 %v192
    %v393 = vunpack.c.l.b16 %v193
    %v394 = vunpack.c.l.b16 %v194
    %v395 = vunpack.c.l.b16 %v195
    %v396 = vunpack.c.l.b16 %v196
    %v397 = vunpack.c.l.b16 %v197
    %v398 = vunpack.c.l.b16 %v198
    %v399 = vunpack.c.l.b16 %v199
    %v400 = vunpack.c.l.b16 %v200
    %v401 = vunpack.c.l.b16 %v201
    %v402 = vunpack.c.l.b16 %v202
    %v403 = vunpack.c.l.b16 %v203
    %v404 = vunpack.c.l.b16 %v204
    %v405 = vunpack.c.l.b16 %v205
    %v406 = vunpack.c.l.b16 %v206
    %v407 = vunpack.c.l.b16 %v207
    %v408 = vunpack.c.l.b16 %v208
    %v409 = vunpack.c.l.b16 %v209
    %v410 = vunpack.c.l.b16 %v210
    %v411 = vunpack.c.l.b16 %v211
    %v412 = vunpack.c.l.b16 %v212
    %v413 = vunpack.c.l.b16 %v213
    %v414 = vunpack.c.l.b16 %v214
    %v415 = vunpack.c.l.b16 %v215
    %v416 = vunpack.c.l.b16 %v216
    %v417 = vunpack.c.l.b16 %v217
    %v418 = vunpack.c.l.b16 %v218
    %v419 = vunpack.c.l.b16 %v219
    %v420 = vunpack.c.l.b16 %v220
    %v421 = vunpack.c.l.b16 %v221
    %v422 = vunpack.c.l.b16 %v222
    %v423 = vunpack.c.l.b16 %v223
    %v424 = vunpack.c.l.b16 %v224
    %v425 = vunpack.c.l.b16 %v225
    %v426 = vunpack.c.l.b16 %v226
    %v427 = vunpack.c.l.b16 %v227
    %v428 = vunpack.c.l.b16 %v228
    %v429 = vunpack.c.l.b16 %v229
    %v430 = vunpack.c.l.b16 %v230
    %v431 = vunpack.c.l.b16 %v231
    %v432 = vunpack.c.l.b16 %v232
    %v433 = vunpack.c.l.b16 %v233
    %v434 = vunpack.c.l.b16 %v234
    %v435 = vunpack.c.l.b16 %v235
    %v436 = vunpack.c.l.b16 %v236
    %v437 = vunpack.c.l.b16 %v237
    %v438 = vunpack.c.l.b16 %v238
    %v439 = vunpack.c.l.b16 %v239
    %v440 = vunpack.c.l.b16 %v240
    %v441 = vunpack.c.l.b16 %v241
    %v442 = vunpack.c.l.b16 %v242
    %v443 = vunpack.c.l.b16 %v243
    %v444 = vunpack.c.l.b16 %v244
    %v445 = vunpack.c.l.b16 %v245
    %v446 = vunpack.c.l.b16 %v246
    %v447 = vunpack.c.l.b16 %v247
    %v448 = vunpack.c.l.b16 %v248
    %v449 = vunpack.c.l.b16 %v249
    %v450 = vunpack.c.l.b16 %v250
    %v451 = vunpack.c.l.b16 %v251
    %v452 = vunpack.c.l.b16 %v252
    %v453 = vunpack.c.l.b16 %v253
    %v454 = vunpack.c.l.b16 %v254
    %v455 = vunpack.c.l.b16 %v255
    %v456 = vunpack.c.l.b16 %v256
    %v457 = vunpack.c.l.b16 %v257
    %v458 = vunpack.c.l.b16 %v258
    %v459 = vunpack.c.l.b16 %v259
    %v460 = vunpack.c.l.b16 %v260
    %v461 = vunpack.c.l.b16 %v261
    %v462 = vunpack.c.l.b16 %v262
    %v463 = vunpack.c.l.b16 %v263
    %v464 = vunpack.c.l.b16 %v264
    %v465 = vunpack.c.l.b16 %v265
    %v466 = vunpack.c.l.b16 %v266
    %v467 = vunpack.c.l.b16 %v267
    %v468 = vunpack.c.l.b16 %v268
    %v469 = vunpack.c.l.b16 %v269
    %v470 = vunpack.c.l.b16 %v270
    %v471 = vunpack.c.l.b16 %v271
    %v472 = vunpack.c.l.b16 %v272
    %v473 = vpack.c.b16 %v376, %v375
    %v474 = vpack.c.b16 %v378, %v377
    %v475 = vpack.c.b16 %v380, %v379
    %v476 = vpack.c.b16 %v382, %v381
    %v477 = vpack.c.b16 %v384, %v383
    %v478 = vpack.c.b16 %v386, %v385
    %v479 = vpack.c.b16 %v388, %v387
    %v480 = vpack.c.b16 %v390, %v389
    %v481 = vpack.c.b16 %v392, %v391
    %v482 = vpack.c.b16 %v394, %v393
    %v483 = vpack.c.b16 %v396, %v395
    %v484 = vpack.c.b16 %v398, %v397
    %v485 = vpack.c.b16 %v400, %v399
    %v486 = vpack.c.b16 %v402, %v401
    %v487 = vpack.c.b16 %v404, %v403
    %v488 = vpack.c.b16 %v406, %v405
    %v489 = vpack.c.b16 %v408, %v407
    %v490 = vpack.c.b16 %v410, %v409
    %v491 = vpack.c.b16 %v412, %v411
    %v492 = vpack.c.b16 %v414, %v413
    %v493 = vpack.c.b16 %v416, %v415
    %v494 = vpack.c.b16 %v418, %v417
    %v495 = vpack.c.b16 %v420, %v419
    %v496 = vpack.c.b16 %v422, %v421
    %v497 = vpack.c.b16 %v424, %v423
    %v498 = vpack.c.b16 %v426, %v425
    %v499 = vpack.c.b16 %v428, %v427
    %v500 = vpack.c.b16 %v430, %v429
    %v501 = vpack.c.b16 %v432, %v431
    %v502 = vpack.c.b16 %v434, %v433
    %v503 = vpack.c.b16 %v436, %v435
    %v504 = vpack.c.b16 %v438, %v437
    %v505 = vpack.c.b16 %v440, %v439
    %v506 = vpack.c.b16 %v442, %v441
    %v507 = vpack.c.b16 %v444, %v443
    %v508 = vpack.c.b16 %v446, %v445
    %v509 = vpack.c.b16 %v448, %v447
    %v510 = vpack.c.b16 %v450, %v449
    %v511 = vpack.c.b16 %v452, %v451
    %v512 = vpack.c.b16 %v454, %v453
    %v513 = vpack.c.b16 %v456, %v455
    %v514 = vpack.c.b16 %v458, %v457
    %v515 = vpack.c.b16 %v460, %v459
    %v516 = vpack.c.b16 %v462, %v461
    %v517 = vpack.c.b16 %v464, %v463
    %v518 = vpack.c.b16 %v466, %v465
    %v519 = vpack.c.b16 %v468, %v467
    %v520 = vpack.c.b16 %v470, %v469
    %v521 = vpack.c.b16 %v472, %v471
    %vm571 = vcmask 130048
    %v573 = vsel %vm571, %v153, 0
    %v576 = vsel %vm571, %v160, 0
    %v579 = vsel %vm571, %v167, 0
    %v582 = vsel %vm571, %v174, 0
    %584 = vmatpush.bf16.msra.mxu0 %v480
    %585 = vmatpush.bf16.msra.mxu0 %v479
    %586 = vmatpush.bf16.msra.mxu0 %v478
    %587 = vmatpush.bf16.msra.mxu0 %v477
    %588 = vmatpush.bf16.msra.mxu0 %v476
    %589 = vmatpush.bf16.msra.mxu0 %v475
    %590 = vmatpush.bf16.msra.mxu0 %v474
    %591 = vmatpush.bf16.msra.mxu0 %v473
    %592 = vmatmul.bf16.gmra.mxu0 %v147
    %v593 = vpop.f32.mrf.mxu0
    %v594 = vadd.f32 %v275, %v593
    %v595 = vpop.f32.mrf.mxu0
    %v596 = vadd.f32 %v275, %v595
    %597 = vmatmul.bf16.gmra.mxu0 %v154
    %v598 = vpop.f32.mrf.mxu0
    %v599 = vadd.f32 %v275, %v598
    %v600 = vpop.f32.mrf.mxu0
    %v601 = vadd.f32 %v275, %v600
    %602 = vmatmul.bf16.gmra.mxu0 %v161
    %v603 = vpop.f32.mrf.mxu0
    %v604 = vadd.f32 %v275, %v603
    %v605 = vpop.f32.mrf.mxu0
    %v606 = vadd.f32 %v275, %v605
    %607 = vmatmul.bf16.gmra.mxu0 %v168
    %v608 = vpop.f32.mrf.mxu0
    %v609 = vadd.f32 %v275, %v608
    %v610 = vpop.f32.mrf.mxu0
    %v611 = vadd.f32 %v275, %v610
    %612 = vdwg.mxu0
    %613 = vmatpush.bf16.msra.mxu0 %v488
    %614 = vmatpush.bf16.msra.mxu0 %v487
    %615 = vmatpush.bf16.msra.mxu0 %v486
    %616 = vmatpush.bf16.msra.mxu0 %v485
    %617 = vmatpush.bf16.msra.mxu0 %v484
    %618 = vmatpush.bf16.msra.mxu0 %v483
    %619 = vmatpush.bf16.msra.mxu0 %v482
    %620 = vmatpush.bf16.msra.mxu0 %v481
    %621 = vmatmul.bf16.gmra.mxu0 %v148
    %v622 = vpop.f32.mrf.mxu0
    %v623 = vadd.f32 %v594, %v622
    %v624 = vpop.f32.mrf.mxu0
    %v625 = vadd.f32 %v596, %v624
    %626 = vmatmul.bf16.gmra.mxu0 %v155
    %v627 = vpop.f32.mrf.mxu0
    %v628 = vadd.f32 %v599, %v627
    %v629 = vpop.f32.mrf.mxu0
    %v630 = vadd.f32 %v601, %v629
    %631 = vmatmul.bf16.gmra.mxu0 %v162
    %v632 = vpop.f32.mrf.mxu0
    %v633 = vadd.f32 %v604, %v632
    %v634 = vpop.f32.mrf.mxu0
    %v635 = vadd.f32 %v606, %v634
    %636 = vmatmul.bf16.gmra.mxu0 %v169
    %v637 = vpop.f32.mrf.mxu0
    %v638 = vadd.f32 %v609, %v637
    %v639 = vpop.f32.mrf.mxu0
    %v640 = vadd.f32 %v611, %v639
    %641 = vdwg.mxu0
    %642 = vmatpush.bf16.msra.mxu0 %v496
    %643 = vmatpush.bf16.msra.mxu0 %v495
    %644 = vmatpush.bf16.msra.mxu0 %v494
    %645 = vmatpush.bf16.msra.mxu0 %v493
    %646 = vmatpush.bf16.msra.mxu0 %v492
    %647 = vmatpush.bf16.msra.mxu0 %v491
    %648 = vmatpush.bf16.msra.mxu0 %v490
    %649 = vmatpush.bf16.msra.mxu0 %v489
    %650 = vmatmul.bf16.gmra.mxu0 %v149
    %v651 = vpop.f32.mrf.mxu0
    %v652 = vadd.f32 %v623, %v651
    %v653 = vpop.f32.mrf.mxu0
    %v654 = vadd.f32 %v625, %v653
    %655 = vmatmul.bf16.gmra.mxu0 %v156
    %v656 = vpop.f32.mrf.mxu0
    %v657 = vadd.f32 %v628, %v656
    %v658 = vpop.f32.mrf.mxu0
    %v659 = vadd.f32 %v630, %v658
    %660 = vmatmul.bf16.gmra.mxu0 %v163
    %v661 = vpop.f32.mrf.mxu0
    %v662 = vadd.f32 %v633, %v661
    %v663 = vpop.f32.mrf.mxu0
    %v664 = vadd.f32 %v635, %v663
    %665 = vmatmul.bf16.gmra.mxu0 %v170
    %v666 = vpop.f32.mrf.mxu0
    %v667 = vadd.f32 %v638, %v666
    %v668 = vpop.f32.mrf.mxu0
    %v669 = vadd.f32 %v640, %v668
    %670 = vdwg.mxu0
    %671 = vmatpush.bf16.msra.mxu0 %v504
    %672 = vmatpush.bf16.msra.mxu0 %v503
    %673 = vmatpush.bf16.msra.mxu0 %v502
    %674 = vmatpush.bf16.msra.mxu0 %v501
    %675 = vmatpush.bf16.msra.mxu0 %v500
    %676 = vmatpush.bf16.msra.mxu0 %v499
    %677 = vmatpush.bf16.msra.mxu0 %v498
    %678 = vmatpush.bf16.msra.mxu0 %v497
    %679 = vmatmul.bf16.gmra.mxu0 %v150
    %v680 = vpop.f32.mrf.mxu0
    %v681 = vadd.f32 %v652, %v680
    %v682 = vpop.f32.mrf.mxu0
    %v683 = vadd.f32 %v654, %v682
    %684 = vmatmul.bf16.gmra.mxu0 %v157
    %v685 = vpop.f32.mrf.mxu0
    %v686 = vadd.f32 %v657, %v685
    %v687 = vpop.f32.mrf.mxu0
    %v688 = vadd.f32 %v659, %v687
    %689 = vmatmul.bf16.gmra.mxu0 %v164
    %v690 = vpop.f32.mrf.mxu0
    %v691 = vadd.f32 %v662, %v690
    %v692 = vpop.f32.mrf.mxu0
    %v693 = vadd.f32 %v664, %v692
    %694 = vmatmul.bf16.gmra.mxu0 %v171
    %v695 = vpop.f32.mrf.mxu0
    %v696 = vadd.f32 %v667, %v695
    %v697 = vpop.f32.mrf.mxu0
    %v698 = vadd.f32 %v669, %v697
    %699 = vdwg.mxu0
    %700 = vmatpush.bf16.msra.mxu0 %v512
    %701 = vmatpush.bf16.msra.mxu0 %v511
    %702 = vmatpush.bf16.msra.mxu0 %v510
    %703 = vmatpush.bf16.msra.mxu0 %v509
    %704 = vmatpush.bf16.msra.mxu0 %v508
    %705 = vmatpush.bf16.msra.mxu0 %v507
    %706 = vmatpush.bf16.msra.mxu0 %v506
    %707 = vmatpush.bf16.msra.mxu0 %v505
    %708 = vmatmul.bf16.gmra.mxu0 %v151
    %v709 = vpop.f32.mrf.mxu0
    %v710 = vadd.f32 %v681, %v709
    %v711 = vpop.f32.mrf.mxu0
    %v712 = vadd.f32 %v683, %v711
    %713 = vmatmul.bf16.gmra.mxu0 %v158
    %v714 = vpop.f32.mrf.mxu0
    %v715 = vadd.f32 %v686, %v714
    %v716 = vpop.f32.mrf.mxu0
    %v717 = vadd.f32 %v688, %v716
    %718 = vmatmul.bf16.gmra.mxu0 %v165
    %v719 = vpop.f32.mrf.mxu0
    %v720 = vadd.f32 %v691, %v719
    %v721 = vpop.f32.mrf.mxu0
    %v722 = vadd.f32 %v693, %v721
    %723 = vmatmul.bf16.gmra.mxu0 %v172
    %v724 = vpop.f32.mrf.mxu0
    %v725 = vadd.f32 %v696, %v724
    %v726 = vpop.f32.mrf.mxu0
    %v727 = vadd.f32 %v698, %v726
    %728 = vdwg.mxu0
    %729 = vmatpush.bf16.msra.mxu0 %v520
    %730 = vmatpush.bf16.msra.mxu0 %v519
    %731 = vmatpush.bf16.msra.mxu0 %v518
    %732 = vmatpush.bf16.msra.mxu0 %v517
    %733 = vmatpush.bf16.msra.mxu0 %v516
    %734 = vmatpush.bf16.msra.mxu0 %v515
    %735 = vmatpush.bf16.msra.mxu0 %v514
    %736 = vmatpush.bf16.msra.mxu0 %v513
    %737 = vmatmul.bf16.gmra.mxu0 %v152
    %v738 = vpop.f32.mrf.mxu0
    %v739 = vadd.f32 %v710, %v738
    %v740 = vpop.f32.mrf.mxu0
    %v741 = vadd.f32 %v712, %v740
    %742 = vmatmul.bf16.gmra.mxu0 %v159
    %v743 = vpop.f32.mrf.mxu0
    %v744 = vadd.f32 %v715, %v743
    %v745 = vpop.f32.mrf.mxu0
    %v746 = vadd.f32 %v717, %v745
    %747 = vmatmul.bf16.gmra.mxu0 %v166
    %v748 = vpop.f32.mrf.mxu0
    %v749 = vadd.f32 %v720, %v748
    %v750 = vpop.f32.mrf.mxu0
    %v751 = vadd.f32 %v722, %v750
    %752 = vmatmul.bf16.gmra.mxu0 %v173
    %v753 = vpop.f32.mrf.mxu0
    %v754 = vadd.f32 %v725, %v753
    %v755 = vpop.f32.mrf.mxu0
    %v756 = vadd.f32 %v727, %v755
    %757 = vdwg.mxu0
    %758 = vmatpush.bf16.msra.mxu0 0
    %759 = vmatpush.bf16.msra.mxu0 0
    %760 = vmatpush.bf16.msra.mxu0 0
    %761 = vmatpush.bf16.msra.mxu0 0
    %762 = vmatpush.bf16.msra.mxu0 0
    %763 = vmatpush.bf16.msra.mxu0 0
    %764 = vmatpush.bf16.msra.mxu0 0
    %765 = vmatpush.bf16.msra.mxu0 %v521
    %766 = vmatmul.bf16.gmra.mxu0 %v573
    %v767 = vpop.f32.mrf.mxu0
    %v768 = vadd.f32 %v739, %v767
    %v769 = vpop.f32.mrf.mxu0
    %v770 = vadd.f32 %v741, %v769
    %771 = vmatmul.bf16.gmra.mxu0 %v576
    %v772 = vpop.f32.mrf.mxu0
    %v773 = vadd.f32 %v744, %v772
    %v774 = vpop.f32.mrf.mxu0
    %v775 = vadd.f32 %v746, %v774
    %776 = vmatmul.bf16.gmra.mxu0 %v579
    %v777 = vpop.f32.mrf.mxu0
    %v778 = vadd.f32 %v749, %v777
    %v779 = vpop.f32.mrf.mxu0
    %v780 = vadd.f32 %v751, %v779
    %781 = vmatmul.bf16.gmra.mxu0 %v582
    %v782 = vpop.f32.mrf.mxu0
    %v783 = vadd.f32 %v754, %v782
    %v784 = vpop.f32.mrf.mxu0
    %v785 = vadd.f32 %v756, %v784
    %786 = vdwg.mxu0
    %v787 = vmax.f32 %v768, 0.0
    %v788 = vmax.f32 %v770, 0.0
    %v789 = vmax.f32 %v773, 0.0
    %v790 = vmax.f32 %v775, 0.0
    %v791 = vmax.f32 %v778, 0.0
    %v792 = vmax.f32 %v780, 0.0
    %v793 = vmax.f32 %v783, 0.0
    %v794 = vmax.f32 %v785, 0.0
    %v795 = vpack.c.bf16 %v788, %v787
    %v796 = vpack.c.bf16 %v790, %v789
    %v797 = vpack.c.bf16 %v792, %v791
    %v798 = vpack.c.bf16 %v794, %v793
    %v799 = vld [vmem:[#allocation7] sm:$0xf]
    %v800 = vld [vmem:[#allocation7 + $0x4] sm:$0xf]
    %v801 = vld [vmem:[#allocation7 + $0x8] sm:$0xf]
    %v802 = vld [vmem:[#allocation7 + $0xc] sm:$0xf]
    %v803 = vld [vmem:[#allocation7 + $0x10] sm:$0xf]
    %v804 = vld [vmem:[#allocation7 + $0x14] sm:$0xf]
    %v805 = vld [vmem:[#allocation7 + $0x18] sm:$0xf]
    %v806 = vld [vmem:[#allocation7 + $0x1c] sm:$0xf]
    %v807 = vld [vmem:[#allocation7 + $0x20] sm:$0xf]
    %v808 = vld [vmem:[#allocation7 + $0x24] sm:$0xf]
    %v809 = vld [vmem:[#allocation7 + $0x28] sm:$0xf]
    %v810 = vld [vmem:[#allocation7 + $0x2c] sm:$0xf]
    %v811 = vld [vmem:[#allocation7 + $0x30] sm:$0xf]
    %v812 = vld [vmem:[#allocation7 + $0x34] sm:$0xf]
    %v813 = vld [vmem:[#allocation7 + $0x38] sm:$0xf]
    %v814 = vld [vmem:[#allocation7 + $0x3c] sm:$0xf]
    %v815 = vld [vmem:[%s4] sm:$0x1]
    %v817 = vperm.slane %v815, 0
    %v835 = vunpack.c.l.b16 %v799
    %v836 = vunpack.c.l.b16 %v800
    %v837 = vunpack.c.l.b16 %v801
    %v838 = vunpack.c.l.b16 %v802
    %v839 = vunpack.c.l.b16 %v803
    %v840 = vunpack.c.l.b16 %v804
    %v841 = vunpack.c.l.b16 %v805
    %v842 = vunpack.c.l.b16 %v806
    %v843 = vunpack.c.l.b16 %v807
    %v844 = vunpack.c.l.b16 %v808
    %v845 = vunpack.c.l.b16 %v809
    %v846 = vunpack.c.l.b16 %v810
    %v847 = vunpack.c.l.b16 %v811
    %v848 = vunpack.c.l.b16 %v812
    %v849 = vunpack.c.l.b16 %v813
    %v850 = vunpack.c.l.b16 %v814
    %v851 = vpack.c.b16 %v836, %v835
    %v852 = vpack.c.b16 %v838, %v837
    %v853 = vpack.c.b16 %v840, %v839
    %v854 = vpack.c.b16 %v842, %v841
    %v855 = vpack.c.b16 %v844, %v843
    %v856 = vpack.c.b16 %v846, %v845
    %v857 = vpack.c.b16 %v848, %v847
    %v858 = vpack.c.b16 %v850, %v849
    %867 = vmatpush.bf16.msra.mxu0 %v858
    %868 = vmatpush.bf16.msra.mxu0 %v857
    %869 = vmatpush.bf16.msra.mxu0 %v856
    %870 = vmatpush.bf16.msra.mxu0 %v855
    %871 = vmatpush.bf16.msra.mxu0 %v854
    %872 = vmatpush.bf16.msra.mxu0 %v853
    %873 = vmatpush.bf16.msra.mxu0 %v852
    %874 = vmatpush.bf16.msra.mxu0 %v851
    %875 = vmatmul.bf16.gmra.mxu0 %v795
    %v876 = vpop.f32.mrf.mxu0
    %v877 = vadd.f32 %v817, %v876
    %v878 = vpop.f32.mrf.mxu0
    %v879 = vadd.f32 %v817, %v878
    %880 = vmatmul.bf16.gmra.mxu0 %v796
    %v881 = vpop.f32.mrf.mxu0
    %v882 = vadd.f32 %v817, %v881
    %v883 = vpop.f32.mrf.mxu0
    %v884 = vadd.f32 %v817, %v883
    %885 = vmatmul.bf16.gmra.mxu0 %v797
    %v886 = vpop.f32.mrf.mxu0
    %v887 = vadd.f32 %v817, %v886
    %v888 = vpop.f32.mrf.mxu0
    %v889 = vadd.f32 %v817, %v888
    %890 = vmatmul.bf16.gmra.mxu0 %v798
    %v891 = vpop.f32.mrf.mxu0
    %v892 = vadd.f32 %v817, %v891
    %v893 = vpop.f32.mrf.mxu0
    %v894 = vadd.f32 %v817, %v893
    %895 = vdwg.mxu0
    %v896 = vmax.f32 %v877, 0.0
    %v897 = vmax.f32 %v879, 0.0
    %v898 = vmax.f32 %v882, 0.0
    %v899 = vmax.f32 %v884, 0.0
    %v900 = vmax.f32 %v887, 0.0
    %v901 = vmax.f32 %v889, 0.0
    %v902 = vmax.f32 %v892, 0.0
    %v903 = vmax.f32 %v894, 0.0
    %v904 = vpack.c.bf16 %v897, %v896
    %v905 = vpack.c.bf16 %v899, %v898
    %v906 = vpack.c.bf16 %v901, %v900
    %v907 = vpack.c.bf16 %v903, %v902
    %v908 = vld [vmem:[#allocation8] sm:$0xf]
    %v909 = vld [vmem:[#allocation8 + $0x4] sm:$0xf]
    %v910 = vld [vmem:[#allocation8 + $0x8] sm:$0xf]
    %v911 = vld [vmem:[#allocation8 + $0xc] sm:$0xf]
    %v912 = vld [vmem:[#allocation8 + $0x10] sm:$0xf]
    %v913 = vld [vmem:[#allocation8 + $0x14] sm:$0xf]
    %v914 = vld [vmem:[#allocation8 + $0x18] sm:$0xf]
    %v915 = vld [vmem:[#allocation8 + $0x1c] sm:$0xf]
    %v916 = vld [vmem:[#allocation8 + $0x20] sm:$0xf]
    %v917 = vld [vmem:[#allocation8 + $0x24] sm:$0xf]
    %v918 = vld [vmem:[#allocation8 + $0x28] sm:$0xf]
    %v919 = vld [vmem:[#allocation8 + $0x2c] sm:$0xf]
    %v920 = vld [vmem:[#allocation8 + $0x30] sm:$0xf]
    %v921 = vld [vmem:[#allocation8 + $0x34] sm:$0xf]
    %v922 = vld [vmem:[#allocation8 + $0x38] sm:$0xf]
    %v923 = vld [vmem:[#allocation8 + $0x3c] sm:$0xf]
    %v924 = vld [vmem:[%s6] sm:$0x1]
    %v926 = vperm.slane %v924, 0
    %v944 = vunpack.c.l.b16 %v908
    %v945 = vunpack.c.l.b16 %v909
    %v946 = vunpack.c.l.b16 %v910
    %v947 = vunpack.c.l.b16 %v911
    %v948 = vunpack.c.l.b16 %v912
    %v949 = vunpack.c.l.b16 %v913
    %v950 = vunpack.c.l.b16 %v914
    %v951 = vunpack.c.l.b16 %v915
    %v952 = vunpack.c.l.b16 %v916
    %v953 = vunpack.c.l.b16 %v917
    %v954 = vunpack.c.l.b16 %v918
    %v955 = vunpack.c.l.b16 %v919
    %v956 = vunpack.c.l.b16 %v920
    %v957 = vunpack.c.l.b16 %v921
    %v958 = vunpack.c.l.b16 %v922
    %v959 = vunpack.c.l.b16 %v923
    %v960 = vpack.c.b16 %v945, %v944
    %v961 = vpack.c.b16 %v947, %v946
    %v962 = vpack.c.b16 %v949, %v948
    %v963 = vpack.c.b16 %v951, %v950
    %v964 = vpack.c.b16 %v953, %v952
    %v965 = vpack.c.b16 %v955, %v954
    %v966 = vpack.c.b16 %v957, %v956
    %v967 = vpack.c.b16 %v959, %v958
    %976 = vmatpush.bf16.msra.mxu0 %v967
    %977 = vmatpush.bf16.msra.mxu0 %v966
    %978 = vmatpush.bf16.msra.mxu0 %v965
    %979 = vmatpush.bf16.msra.mxu0 %v964
    %980 = vmatpush.bf16.msra.mxu0 %v963
    %981 = vmatpush.bf16.msra.mxu0 %v962
    %982 = vmatpush.bf16.msra.mxu0 %v961
    %983 = vmatpush.bf16.msra.mxu0 %v960
    %984 = vmatmul.bf16.gmra.mxu0 %v904
    %v985 = vpop.f32.mrf.mxu0
    %v986 = vadd.f32 %v926, %v985
    %v987 = vpop.f32.mrf.mxu0
    %v988 = vadd.f32 %v926, %v987
    %989 = vmatmul.bf16.gmra.mxu0 %v905
    %v990 = vpop.f32.mrf.mxu0
    %v991 = vadd.f32 %v926, %v990
    %v992 = vpop.f32.mrf.mxu0
    %v993 = vadd.f32 %v926, %v992
    %994 = vmatmul.bf16.gmra.mxu0 %v906
    %v995 = vpop.f32.mrf.mxu0
    %v996 = vadd.f32 %v926, %v995
    %v997 = vpop.f32.mrf.mxu0
    %v998 = vadd.f32 %v926, %v997
    %999 = vmatmul.bf16.gmra.mxu0 %v907
    %v1000 = vpop.f32.mrf.mxu0
    %v1001 = vadd.f32 %v926, %v1000
    %v1002 = vpop.f32.mrf.mxu0
    %v1003 = vadd.f32 %v926, %v1002
    %1004 = vdwg.mxu0
    %1005 = vmax.xlane.f32.xlu0 %v986
    %v1006 = vpop.xlane.xlu0 %1005
    %1007 = vmax.xlane.f32.xlu0 %v988
    %v1008 = vpop.xlane.xlu0 %1007
    %1009 = vmax.xlane.f32.xlu0 %v991
    %v1010 = vpop.xlane.xlu0 %1009
    %1011 = vmax.xlane.f32.xlu0 %v993
    %v1012 = vpop.xlane.xlu0 %1011
    %1013 = vmax.xlane.f32.xlu0 %v996
    %v1014 = vpop.xlane.xlu0 %1013
    %1015 = vmax.xlane.f32.xlu0 %v998
    %v1016 = vpop.xlane.xlu0 %1015
    %1017 = vmax.xlane.f32.xlu0 %v1001
    %v1018 = vpop.xlane.xlu0 %1017
    %1019 = vmax.xlane.f32.xlu0 %v1003
    %v1020 = vpop.xlane.xlu0 %1019
    %v1021 = vsub.f32 %v986, %v1006
    %v1022 = vsub.f32 %v988, %v1008
    %v1023 = vsub.f32 %v991, %v1010
    %v1024 = vsub.f32 %v993, %v1012
    %v1025 = vsub.f32 %v996, %v1014
    %v1026 = vsub.f32 %v998, %v1016
    %v1027 = vsub.f32 %v1001, %v1018
    %v1028 = vsub.f32 %v1003, %v1020
    %v1029 = vmul.f32 %v1021, 1.442695
    %v1030 = vpow.pop %v1029
    %v1031 = vmul.f32 %v1022, 1.442695
    %v1032 = vpow.pop %v1031
    %v1033 = vmul.f32 %v1023, 1.442695
    %v1034 = vpow.pop %v1033
    %v1035 = vmul.f32 %v1024, 1.442695
    %v1036 = vpow.pop %v1035
    %v1037 = vmul.f32 %v1025, 1.442695
    %v1038 = vpow.pop %v1037
    %v1039 = vmul.f32 %v1026, 1.442695
    %v1040 = vpow.pop %v1039
    %v1041 = vmul.f32 %v1027, 1.442695
    %v1042 = vpow.pop %v1041
    %v1043 = vmul.f32 %v1028, 1.442695
    %v1044 = vpow.pop %v1043
    %1045 = vadd.xlane.f32.xlu0 %v1030
    %v1046 = vpop.xlane.xlu0 %1045
    %1047 = vadd.xlane.f32.xlu0 %v1032
    %v1048 = vpop.xlane.xlu0 %1047
    %1049 = vadd.xlane.f32.xlu0 %v1034
    %v1050 = vpop.xlane.xlu0 %1049
    %1051 = vadd.xlane.f32.xlu0 %v1036
    %v1052 = vpop.xlane.xlu0 %1051
    %1053 = vadd.xlane.f32.xlu0 %v1038
    %v1054 = vpop.xlane.xlu0 %1053
    %1055 = vadd.xlane.f32.xlu0 %v1040
    %v1056 = vpop.xlane.xlu0 %1055
    %1057 = vadd.xlane.f32.xlu0 %v1042
    %v1058 = vpop.xlane.xlu0 %1057
    %1059 = vadd.xlane.f32.xlu0 %v1044
    %v1060 = vpop.xlane.xlu0 %1059
    %v1061 = vlog2.pop %v1046
    %v1062 = vmul.f32 %v1061, 0.6931472
    %v1063 = vlog2.pop %v1048
    %v1064 = vmul.f32 %v1063, 0.6931472
    %v1065 = vlog2.pop %v1050
    %v1066 = vmul.f32 %v1065, 0.6931472
    %v1067 = vlog2.pop %v1052
    %v1068 = vmul.f32 %v1067, 0.6931472
    %v1069 = vlog2.pop %v1054
    %v1070 = vmul.f32 %v1069, 0.6931472
    %v1071 = vlog2.pop %v1056
    %v1072 = vmul.f32 %v1071, 0.6931472
    %v1073 = vlog2.pop %v1058
    %v1074 = vmul.f32 %v1073, 0.6931472
    %v1075 = vlog2.pop %v1060
    %v1076 = vmul.f32 %v1075, 0.6931472
    %v1077 = vsub.f32 %v1021, %v1062
    %v1078 = vsub.f32 %v1022, %v1064
    %v1079 = vsub.f32 %v1023, %v1066
    %v1080 = vsub.f32 %v1024, %v1068
    %v1081 = vsub.f32 %v1025, %v1070
    %v1082 = vsub.f32 %v1026, %v1072
    %v1083 = vsub.f32 %v1027, %v1074
    %v1084 = vsub.f32 %v1028, %v1076
    %1085 = vst [vmem:[#allocation10] sm:$0xff] %v1077
    %1086 = vst [vmem:[#allocation10 + $0x8] sm:$0xff] %v1078
    %1087 = vst [vmem:[#allocation10 + $0x10] sm:$0xff] %v1079
    %1088 = vst [vmem:[#allocation10 + $0x18] sm:$0xff] %v1080
    %1089 = vst [vmem:[#allocation10 + $0x20] sm:$0xff] %v1081
    %1090 = vst [vmem:[#allocation10 + $0x28] sm:$0xff] %v1082
    %1091 = vst [vmem:[#allocation10 + $0x30] sm:$0xff] %v1083
    %1092 = vst [vmem:[#allocation10 + $0x38] sm:$0xff] %v1084
    // Predicated region
    $region46: #{tpu_custom_call.1} parent=1 // pred_check
      _
    $region47: #{tpu_custom_call.1} parent=1 // pred_check_branch
      %1094 = sbr.rel (0) target = $region49
    $region48: #{tpu_custom_call.1} parent=1 // pred_region
      %1096 = vsyncadd [#allocation4], 0
      %s1097 = sshll.u32 [#allocation10], 4
      %s1098 = int_to_ptr.vmem [resolvable:$true] %s1097
      %s1099 = sshll.u32 %s7, 4
      %s1100 = int_to_ptr.hbm [resolvable:$true] %s1099
      %1105 = dma.vmem_to_hbm [thread:$0]  %s1098, 1024, %s1100, [#allocation4], 128, 128, 8
    $region49: #{tpu_custom_call.1} parent=1 // pred_fallthru
      _
    // Predicated region
    $region50: #{tpu_custom_call.1} parent=1 // pred_check
      _
    $region51: #{tpu_custom_call.1} parent=1 // pred_check_branch
      %1107 = sbr.rel (0) target = $region53
    $region52: #{tpu_custom_call.1} parent=1 // pred_region
      %1109 = dma.done [#allocation4], 1024
    $region53: #{tpu_custom_call.1} parent=1 // pred_fallthru
      _
    %1110 = vsyncpa [#allocation3], 1
    %1111 = vsyncpa [#allocation6], 1
    %1112 = vsyncpa [#allocation9], 1
    %1113 = vsyncpa [#allocation4], 1

</llo_original>
